<compile_context>
chip_gen: v7x
topology: tpu7x:2x2x1
jax: 0.10.0
libtpu: 0.0.40
codegen_flags: <defaults>
</compile_context>

<pallas_src>
import jax
import jax.numpy as jnp
from jax.experimental import pallas as pl
from jax.experimental.pallas import tpu as pltpu

_LANE = 128      # vreg lane width
_SUBLANE = 8     # vreg sublane count (f32)


def _autoencoder_kernel(x_ref,
                        w1_ref, b1_ref,
                        w2_ref, b2_ref,
                        w3_ref, b3_ref,
                        w4_ref, b4_ref,
                        o_ref):
    x = x_ref[...]
    # Encoder: Linear -> ReLU -> Linear -> ReLU  (intermediates stay in vregs)
    h = jnp.dot(x, w1_ref[...], preferred_element_type=jnp.float32) + b1_ref[...]
    h = jnp.maximum(h, 0.0)
    h = jnp.dot(h, w2_ref[...], preferred_element_type=jnp.float32) + b2_ref[...]
    h = jnp.maximum(h, 0.0)
    # Decoder: Linear -> ReLU -> Linear
    h = jnp.dot(h, w3_ref[...], preferred_element_type=jnp.float32) + b3_ref[...]
    h = jnp.maximum(h, 0.0)
    out = jnp.dot(h, w4_ref[...], preferred_element_type=jnp.float32) + b4_ref[...]
    o_ref[...] = out.astype(o_ref.dtype)


def _round_up(n, m):
    return ((n + m - 1) // m) * m


def _resident_spec(arr):
    # Full-extent block, VMEM-resident across all batch tiles.
    # ndim bound via default arg to avoid the late-binding lambda bug.
    return pl.BlockSpec(arr.shape, lambda i, _nd=arr.ndim: (0,) * _nd)


def dynamic_autoencoder(x, params, *, block_rows=512):
    """x: [B, input_dim] float32. params: dict from init_params."""
    B, input_dim = x.shape
    P = _round_up(max(input_dim, _LANE), _LANE)  # lane-dense feature dim

    # Lane-dense zero padding of the feature dimension (exact math:
    # padded x columns hit zero rows of w1; padded output columns come from
    # zero columns of w4 and zero b4 entries).
    xp = jnp.pad(x, ((0, 0), (0, P - input_dim)))
    w1 = jnp.pad(params["w1"], ((0, P - input_dim), (0, 0)))
    w4 = jnp.pad(params["w4"], ((0, 0), (0, P - input_dim)))
    b4 = jnp.pad(params["b4"], ((0, 0), (0, P - input_dim)))
    b1, w2, b2, w3, b3 = (params["b1"], params["w2"], params["b2"],
                          params["w3"], params["b3"])

    # Batch tiling: BM rows per grid step, batch padded up to a multiple.
    bm = _round_up(min(block_rows, _round_up(B, _SUBLANE)), _SUBLANE)
    Bp = _round_up(B, bm)
    if Bp != B:
        xp = jnp.pad(xp, ((0, Bp - B), (0, 0)))

    weights = (w1, b1, w2, b2, w3, b3, w4, b4)

    out = pl.pallas_call(
        _autoencoder_kernel,
        out_shape=jax.ShapeDtypeStruct((Bp, P), jnp.float32),
        grid=(Bp // bm,),
        in_specs=[pl.BlockSpec((bm, P), lambda i: (i, 0))]
                + [_resident_spec(a) for a in weights],
        out_specs=pl.BlockSpec((bm, P), lambda i: (i, 0)),
        compiler_params=pltpu.CompilerParams(
            dimension_semantics=("parallel",)),
    )(xp, *weights)

    return out[:B, :input_dim]


def init_params(key, input_dim=9, ld=4):
    """Deterministic synthetic parameters matching the PyTorch module shapes.

    PyTorch layers (out, in):
      encoder[0]: (2*ld, input_dim)   encoder[2]: (ld, 2*ld)
      decoder[0]: (2*ld, ld)          decoder[2]: (input_dim, 2*ld)
    Stored here transposed as (in, out) for x @ W.
    """
    dims = [(input_dim, 2 * ld), (2 * ld, ld), (ld, 2 * ld), (2 * ld, input_dim)]
    params = {}
    for i, (fan_in, fan_out) in enumerate(dims, start=1):
        key, kw, kb = jax.random.split(key, 3)
        bound = 1.0 / jnp.sqrt(fan_in)
        params[f"w{i}"] = jax.random.uniform(
            kw, (fan_in, fan_out), jnp.float32, -bound, bound)
        params[f"b{i}"] = jax.random.uniform(
            kb, (1, fan_out), jnp.float32, -bound, bound)
    return params


def _reference(x, p):
    h = jnp.maximum(x @ p["w1"] + p["b1"], 0.0)
    h = jnp.maximum(h @ p["w2"] + p["b2"], 0.0)
    h = jnp.maximum(h @ p["w3"] + p["b3"], 0.0)
    return h @ p["w4"] + p["b4"]


if __name__ == "__main__":
    input_dim, ld = 9, 4
    key = jax.random.PRNGKey(0)
    key, kx1, kx2 = jax.random.split(key, 3)
    params = init_params(key, input_dim=input_dim, ld=ld)

    # Small case (single batch tile).
    x_small = jax.random.normal(kx1, (8, input_dim), jnp.float32)
    out_small = jax.block_until_ready(dynamic_autoencoder(x_small, params))
    assert out_small.shape == (8, input_dim)
    assert jnp.allclose(out_small, _reference(x_small, params),
                        atol=1e-5, rtol=1e-5)

    # Ragged medium case exercising the batch grid + row/column padding.
    x_med = jax.random.normal(kx2, (1000, input_dim), jnp.float32)
    out_med = jax.block_until_ready(
        dynamic_autoencoder(x_med, params, block_rows=256))
    assert out_med.shape == (1000, input_dim)
    assert jnp.allclose(out_med, _reference(x_med, params),
                        atol=1e-5, rtol=1e-5)

    print("KERNEL_OK")
</pallas_src>

<mosaic_0001>
module attributes {stable_mosaic.version = 11 : i64} {
  func.func @_autoencoder_kernel(%arg0: i32, %arg1: memref<8x128xf32, #tpu.memory_space<vmem>>, %arg2: memref<128x8xf32, #tpu.memory_space<vmem>>, %arg3: memref<1x8xf32, #tpu.memory_space<vmem>>, %arg4: memref<8x4xf32, #tpu.memory_space<vmem>>, %arg5: memref<1x4xf32, #tpu.memory_space<vmem>>, %arg6: memref<4x8xf32, #tpu.memory_space<vmem>>, %arg7: memref<1x8xf32, #tpu.memory_space<vmem>>, %arg8: memref<8x128xf32, #tpu.memory_space<vmem>>, %arg9: memref<1x128xf32, #tpu.memory_space<vmem>>, %arg10: memref<8x128xf32, #tpu.memory_space<vmem>>) attributes {dimension_semantics = [#tpu.dimension_semantics<parallel>], iteration_bounds = array<i64: 1>, scalar_prefetch = 0 : i64, scratch_operands = 0 : i64, tpu.core_type = #tpu.core_type<tc>, window_params = [{transform_indices = @transform_0, window_bounds = array<i64: 8, 128>}, {pipeline_mode = #tpu.pipeline_mode<synchronous>, transform_indices = @transform_1, window_bounds = array<i64: 128, 8>}, {pipeline_mode = #tpu.pipeline_mode<synchronous>, transform_indices = @transform_2, window_bounds = array<i64: 1, 8>}, {pipeline_mode = #tpu.pipeline_mode<synchronous>, transform_indices = @transform_3, window_bounds = array<i64: 8, 4>}, {pipeline_mode = #tpu.pipeline_mode<synchronous>, transform_indices = @transform_4, window_bounds = array<i64: 1, 4>}, {pipeline_mode = #tpu.pipeline_mode<synchronous>, transform_indices = @transform_5, window_bounds = array<i64: 4, 8>}, {pipeline_mode = #tpu.pipeline_mode<synchronous>, transform_indices = @transform_6, window_bounds = array<i64: 1, 8>}, {pipeline_mode = #tpu.pipeline_mode<synchronous>, transform_indices = @transform_7, window_bounds = array<i64: 8, 128>}, {pipeline_mode = #tpu.pipeline_mode<synchronous>, transform_indices = @transform_8, window_bounds = array<i64: 1, 128>}, {transform_indices = @transform_9, window_bounds = array<i64: 8, 128>}]} {
    %c0 = arith.constant 0 : index
    %c0_0 = arith.constant 0 : index
    %0 = vector.load %arg1[%c0, %c0_0] : memref<8x128xf32, #tpu.memory_space<vmem>>, vector<8x128xf32>
    %c0_1 = arith.constant 0 : index
    %c0_2 = arith.constant 0 : index
    %1 = vector.load %arg2[%c0_1, %c0_2] : memref<128x8xf32, #tpu.memory_space<vmem>>, vector<128x8xf32>
    %cst = arith.constant dense<0.000000e+00> : vector<8x8xf32>
    %2 = tpu.matmul %0, %1, %cst {dimension_numbers = #tpu.dot_dimension_numbers<[1], [0], [0], [1], [0, 0, 1, 1], [], []>} : vector<8x128xf32>, vector<128x8xf32>, vector<8x8xf32> -> vector<8x8xf32>
    %c0_3 = arith.constant 0 : index
    %c0_4 = arith.constant 0 : index
    %3 = vector.load %arg3[%c0_3, %c0_4] : memref<1x8xf32, #tpu.memory_space<vmem>>, vector<1x8xf32>
    %4 = vector.broadcast %3 : vector<1x8xf32> to vector<8x8xf32>
    %5 = arith.addf %2, %4 : vector<8x8xf32>
    %cst_5 = arith.constant 0.000000e+00 : f32
    %6 = vector.broadcast %cst_5 : f32 to vector<8x8xf32>
    %7 = arith.maximumf %5, %6 : vector<8x8xf32>
    %c0_6 = arith.constant 0 : index
    %c0_7 = arith.constant 0 : index
    %8 = vector.load %arg4[%c0_6, %c0_7] : memref<8x4xf32, #tpu.memory_space<vmem>>, vector<8x4xf32>
    %cst_8 = arith.constant dense<0.000000e+00> : vector<8x4xf32>
    %9 = tpu.matmul %7, %8, %cst_8 {dimension_numbers = #tpu.dot_dimension_numbers<[1], [0], [0], [1], [0, 0, 1, 1], [], []>} : vector<8x8xf32>, vector<8x4xf32>, vector<8x4xf32> -> vector<8x4xf32>
    %c0_9 = arith.constant 0 : index
    %c0_10 = arith.constant 0 : index
    %10 = vector.load %arg5[%c0_9, %c0_10] : memref<1x4xf32, #tpu.memory_space<vmem>>, vector<1x4xf32>
    %11 = vector.broadcast %10 : vector<1x4xf32> to vector<8x4xf32>
    %12 = arith.addf %9, %11 : vector<8x4xf32>
    %cst_11 = arith.constant 0.000000e+00 : f32
    %13 = vector.broadcast %cst_11 : f32 to vector<8x4xf32>
    %14 = arith.maximumf %12, %13 : vector<8x4xf32>
    %c0_12 = arith.constant 0 : index
    %c0_13 = arith.constant 0 : index
    %15 = vector.load %arg6[%c0_12, %c0_13] : memref<4x8xf32, #tpu.memory_space<vmem>>, vector<4x8xf32>
    %cst_14 = arith.constant dense<0.000000e+00> : vector<8x8xf32>
    %16 = tpu.matmul %14, %15, %cst_14 {dimension_numbers = #tpu.dot_dimension_numbers<[1], [0], [0], [1], [0, 0, 1, 1], [], []>} : vector<8x4xf32>, vector<4x8xf32>, vector<8x8xf32> -> vector<8x8xf32>
    %c0_15 = arith.constant 0 : index
    %c0_16 = arith.constant 0 : index
    %17 = vector.load %arg7[%c0_15, %c0_16] : memref<1x8xf32, #tpu.memory_space<vmem>>, vector<1x8xf32>
    %18 = vector.broadcast %17 : vector<1x8xf32> to vector<8x8xf32>
    %19 = arith.addf %16, %18 : vector<8x8xf32>
    %cst_17 = arith.constant 0.000000e+00 : f32
    %20 = vector.broadcast %cst_17 : f32 to vector<8x8xf32>
    %21 = arith.maximumf %19, %20 : vector<8x8xf32>
    %c0_18 = arith.constant 0 : index
    %c0_19 = arith.constant 0 : index
    %22 = vector.load %arg8[%c0_18, %c0_19] : memref<8x128xf32, #tpu.memory_space<vmem>>, vector<8x128xf32>
    %cst_20 = arith.constant dense<0.000000e+00> : vector<8x128xf32>
    %23 = tpu.matmul %21, %22, %cst_20 {dimension_numbers = #tpu.dot_dimension_numbers<[1], [0], [0], [1], [0, 0, 1, 1], [], []>} : vector<8x8xf32>, vector<8x128xf32>, vector<8x128xf32> -> vector<8x128xf32>
    %c0_21 = arith.constant 0 : index
    %c0_22 = arith.constant 0 : index
    %24 = vector.load %arg9[%c0_21, %c0_22] : memref<1x128xf32, #tpu.memory_space<vmem>>, vector<1x128xf32>
    %25 = vector.broadcast %24 : vector<1x128xf32> to vector<8x128xf32>
    %26 = arith.addf %23, %25 : vector<8x128xf32>
    %c0_23 = arith.constant 0 : index
    %c0_24 = arith.constant 0 : index
    %27 = vector.load %arg10[%c0_23, %c0_24] : memref<8x128xf32, #tpu.memory_space<vmem>>, vector<8x128xf32>
    tpu.vector_store %arg10[%c0_23, %c0_24], %26 {strides = array<i32>} : memref<8x128xf32, #tpu.memory_space<vmem>>, vector<8x128xf32>,
    return
  }
  func.func @transform_0(%arg0: i32) -> (i32, i32) {
    %c0_i32 = arith.constant 0 : i32
    %c0_i32_0 = arith.constant 0 : i32
    return %arg0, %c0_i32 : i32, i32
  }
  func.func @transform_1(%arg0: i32) -> (i32, i32) {
    %c0_i32 = arith.constant 0 : i32
    %c0_i32_0 = arith.constant 0 : i32
    %c0_i32_1 = arith.constant 0 : i32
    return %c0_i32, %c0_i32_0 : i32, i32
  }
  func.func @transform_2(%arg0: i32) -> (i32, i32) {
    %c0_i32 = arith.constant 0 : i32
    %c0_i32_0 = arith.constant 0 : i32
    %c0_i32_1 = arith.constant 0 : i32
    return %c0_i32, %c0_i32_0 : i32, i32
  }
  func.func @transform_3(%arg0: i32) -> (i32, i32) {
    %c0_i32 = arith.constant 0 : i32
    %c0_i32_0 = arith.constant 0 : i32
    %c0_i32_1 = arith.constant 0 : i32
    return %c0_i32, %c0_i32_0 : i32, i32
  }
  func.func @transform_4(%arg0: i32) -> (i32, i32) {
    %c0_i32 = arith.constant 0 : i32
    %c0_i32_0 = arith.constant 0 : i32
    %c0_i32_1 = arith.constant 0 : i32
    return %c0_i32, %c0_i32_0 : i32, i32
  }
  func.func @transform_5(%arg0: i32) -> (i32, i32) {
    %c0_i32 = arith.constant 0 : i32
    %c0_i32_0 = arith.constant 0 : i32
    %c0_i32_1 = arith.constant 0 : i32
    return %c0_i32, %c0_i32_0 : i32, i32
  }
  func.func @transform_6(%arg0: i32) -> (i32, i32) {
    %c0_i32 = arith.constant 0 : i32
    %c0_i32_0 = arith.constant 0 : i32
    %c0_i32_1 = arith.constant 0 : i32
    return %c0_i32, %c0_i32_0 : i32, i32
  }
  func.func @transform_7(%arg0: i32) -> (i32, i32) {
    %c0_i32 = arith.constant 0 : i32
    %c0_i32_0 = arith.constant 0 : i32
    %c0_i32_1 = arith.constant 0 : i32
    return %c0_i32, %c0_i32_0 : i32, i32
  }
  func.func @transform_8(%arg0: i32) -> (i32, i32) {
    %c0_i32 = arith.constant 0 : i32
    %c0_i32_0 = arith.constant 0 : i32
    %c0_i32_1 = arith.constant 0 : i32
    return %c0_i32, %c0_i32_0 : i32, i32
  }
  func.func @transform_9(%arg0: i32) -> (i32, i32) {
    %c0_i32 = arith.constant 0 : i32
    %c0_i32_0 = arith.constant 0 : i32
    return %arg0, %c0_i32 : i32, i32
  }
}

</mosaic_0001>

<llo_original>
// kernel: tpu_custom_call.1
$region0: #{tpu_custom_call.1}
  #allocation0 [shape = 'u32[]', space=smem, size = 0x4, offset = 0x4, fixed_abs, tag = 'smem constant byte address 0x4 - core index']
  #allocation1 [shape = 'u32[144,128]{1,0:T(1,128)}', space=vmem, size = 0x12000, scoped, tag = 'internal scratch']
  %s0 = inlined_call_operand.vmem [shape: f32[8,128], index: 0, kind: input, shape index: {}]
  %s1 = inlined_call_operand.vmem [shape: f32[128,8], index: 1, kind: input, shape index: {}]
  %s2 = inlined_call_operand.vmem [shape: f32[1,8], index: 2, kind: input, shape index: {}]
  %s3 = inlined_call_operand.vmem [shape: f32[8,4], index: 3, kind: input, shape index: {}]
  %s4 = inlined_call_operand.vmem [shape: f32[1,4], index: 4, kind: input, shape index: {}]
  %s5 = inlined_call_operand.vmem [shape: f32[4,8], index: 5, kind: input, shape index: {}]
  %s6 = inlined_call_operand.vmem [shape: f32[1,8], index: 6, kind: input, shape index: {}]
  %s7 = inlined_call_operand.vmem [shape: f32[8,128], index: 7, kind: input, shape index: {}]
  %s8 = inlined_call_operand.vmem [shape: f32[1,128], index: 8, kind: input, shape index: {}]
  %s9 = inlined_call_operand.hbm [shape: f32[8,128], index: 9, kind: output, shape index: {}]
  %s10 = sld [smem:[#allocation0]]
  $region46: #{tpu_custom_call.1} parent=0
    _
  %s12 = ssub.s32 1, %s10
  %s13 = scalar_select 0, %s12, %s10
  $region1: #{tpu_custom_call.1} parent=0
    #allocation2 [shape = 'u8[4096]{0}', space=vmem, size = 0x1000, scoped, tag = 'output window, operand 0, single buffered']
    #allocation3 [shape = 's32[1]{0}', space=sflag, size = 0x4, scoped, tag = 'scoped memory for tpu_custom_call.1']
    %14 = vsyncpa [#allocation3], 0
    // Predicated region
    $region2: #{tpu_custom_call.1} parent=1 // pred_check
      _
    $region3: #{tpu_custom_call.1} parent=1 // pred_check_branch
      %16 = sbr.rel (0) target = $region5
    $region4: #{tpu_custom_call.1} parent=1 // pred_region
      _
    $region5: #{tpu_custom_call.1} parent=1 // pred_fallthru
      _
    // Predicated region
    $region6: #{tpu_custom_call.1} parent=1 // pred_check
      _
    $region7: #{tpu_custom_call.1} parent=1 // pred_check_branch
      %18 = sbr.rel (0) target = $region9
    $region8: #{tpu_custom_call.1} parent=1 // pred_region
      _
    $region9: #{tpu_custom_call.1} parent=1 // pred_fallthru
      _
    // Predicated region
    $region10: #{tpu_custom_call.1} parent=1 // pred_check
      _
    $region11: #{tpu_custom_call.1} parent=1 // pred_check_branch
      %20 = sbr.rel (0) target = $region13
    $region12: #{tpu_custom_call.1} parent=1 // pred_region
      _
    $region13: #{tpu_custom_call.1} parent=1 // pred_fallthru
      _
    // Predicated region
    $region14: #{tpu_custom_call.1} parent=1 // pred_check
      _
    $region15: #{tpu_custom_call.1} parent=1 // pred_check_branch
      %22 = sbr.rel (0) target = $region17
    $region16: #{tpu_custom_call.1} parent=1 // pred_region
      _
    $region17: #{tpu_custom_call.1} parent=1 // pred_fallthru
      _
    // Predicated region
    $region18: #{tpu_custom_call.1} parent=1 // pred_check
      _
    $region19: #{tpu_custom_call.1} parent=1 // pred_check_branch
      %24 = sbr.rel (0) target = $region21
    $region20: #{tpu_custom_call.1} parent=1 // pred_region
      _
    $region21: #{tpu_custom_call.1} parent=1 // pred_fallthru
      _
    // Predicated region
    $region22: #{tpu_custom_call.1} parent=1 // pred_check
      _
    $region23: #{tpu_custom_call.1} parent=1 // pred_check_branch
      %26 = sbr.rel (0) target = $region25
    $region24: #{tpu_custom_call.1} parent=1 // pred_region
      _
    $region25: #{tpu_custom_call.1} parent=1 // pred_fallthru
      _
    // Predicated region
    $region26: #{tpu_custom_call.1} parent=1 // pred_check
      _
    $region27: #{tpu_custom_call.1} parent=1 // pred_check_branch
      %28 = sbr.rel (0) target = $region29
    $region28: #{tpu_custom_call.1} parent=1 // pred_region
      _
    $region29: #{tpu_custom_call.1} parent=1 // pred_fallthru
      _
    // Predicated region
    $region30: #{tpu_custom_call.1} parent=1 // pred_check
      _
    $region31: #{tpu_custom_call.1} parent=1 // pred_check_branch
      %30 = sbr.rel (0) target = $region33
    $region32: #{tpu_custom_call.1} parent=1 // pred_region
      _
    $region33: #{tpu_custom_call.1} parent=1 // pred_fallthru
      _
    // Predicated region
    $region34: #{tpu_custom_call.1} parent=1 // pred_check
      _
    $region35: #{tpu_custom_call.1} parent=1 // pred_check_branch
      %32 = sbr.rel (0) target = $region37
    $region36: #{tpu_custom_call.1} parent=1 // pred_region
      _
    $region37: #{tpu_custom_call.1} parent=1 // pred_fallthru
      _
    %v33 = vld [vmem:[%s0] sm:$0xff]
    %v34 = vld [vmem:[%s1] sm:$0xff]
    %v35 = vld [vmem:[%s1 + $0x8] sm:$0xff]
    %v36 = vld [vmem:[%s1 + $0x10] sm:$0xff]
    %v37 = vld [vmem:[%s1 + $0x18] sm:$0xff]
    %v38 = vld [vmem:[%s1 + $0x20] sm:$0xff]
    %v39 = vld [vmem:[%s1 + $0x28] sm:$0xff]
    %v40 = vld [vmem:[%s1 + $0x30] sm:$0xff]
    %v41 = vld [vmem:[%s1 + $0x38] sm:$0xff]
    %v42 = vld [vmem:[%s1 + $0x40] sm:$0xff]
    %v43 = vld [vmem:[%s1 + $0x48] sm:$0xff]
    %v44 = vld [vmem:[%s1 + $0x50] sm:$0xff]
    %v45 = vld [vmem:[%s1 + $0x58] sm:$0xff]
    %v46 = vld [vmem:[%s1 + $0x60] sm:$0xff]
    %v47 = vld [vmem:[%s1 + $0x68] sm:$0xff]
    %v48 = vld [vmem:[%s1 + $0x70] sm:$0xff]
    %v49 = vld [vmem:[%s1 + $0x78] sm:$0xff]
    %v50 = vld [vmem:[%s2] sm:$0x1]
    %v52 = vlaneseq
    %v53 = vshrl.u32 %v52, 7
    %v54 = vsub.s32 0, %v53
    %v55 = vrot.slane %v50, %v54
    %57 = vmatprep.subr.mxu0 0.0
    %58 = vmatpush1.msra.mxu0 %v34
    %59 = vmatprep.subr.mxu0 0.0
    %60 = vmatpush1.msra.mxu0 %v35
    %61 = vmatprep.subr.mxu0 0.0
    %62 = vmatpush1.msra.mxu0 %v36
    %63 = vmatprep.subr.mxu0 0.0
    %64 = vmatpush1.msra.mxu0 %v37
    %65 = vmatprep.subr.mxu0 0.0
    %66 = vmatpush1.msra.mxu0 %v38
    %67 = vmatprep.subr.mxu0 0.0
    %68 = vmatpush1.msra.mxu0 %v39
    %69 = vmatprep.subr.mxu0 0.0
    %70 = vmatpush1.msra.mxu0 %v40
    %71 = vmatprep.subr.mxu0 0.0
    %72 = vmatpush1.msra.mxu0 %v41
    %73 = vmatprep.subr.mxu0 0.0
    %74 = vmatpush1.msra.mxu0 %v42
    %75 = vmatprep.subr.mxu0 0.0
    %76 = vmatpush1.msra.mxu0 %v43
    %77 = vmatprep.subr.mxu0 0.0
    %78 = vmatpush1.msra.mxu0 %v44
    %79 = vmatprep.subr.mxu0 0.0
    %80 = vmatpush1.msra.mxu0 %v45
    %81 = vmatprep.subr.mxu0 0.0
    %82 = vmatpush1.msra.mxu0 %v46
    %83 = vmatprep.subr.mxu0 0.0
    %84 = vmatpush1.msra.mxu0 %v47
    %85 = vmatprep.subr.mxu0 0.0
    %86 = vmatpush1.msra.mxu0 %v48
    %87 = vmatprep.subr.mxu0 0.0
    %88 = vmatpush1.msra.mxu0 %v49
    %89 = vmatprep.subr.mxu0 0.0
    %90 = vmatpush1.msra.mxu0 0.0
    %91 = vmatprep.subr.mxu0 0.0
    %92 = vmatpush1.msra.mxu0 0.0
    %93 = vmatprep.subr.mxu0 0.0
    %94 = vmatpush1.msra.mxu0 0.0
    %95 = vmatprep.subr.mxu0 0.0
    %96 = vmatpush1.msra.mxu0 0.0
    %97 = vmatprep.subr.mxu0 0.0
    %98 = vmatpush1.msra.mxu0 0.0
    %99 = vmatprep.subr.mxu0 0.0
    %100 = vmatpush1.msra.mxu0 0.0
    %101 = vmatprep.subr.mxu0 0.0
    %102 = vmatpush1.msra.mxu0 0.0
    %103 = vmatprep.subr.mxu0 0.0
    %104 = vmatpush1.msra.mxu0 0.0
    %105 = vmatprep.subr.mxu0 0.0
    %106 = vmatpush1.msra.mxu0 0.0
    %107 = vmatprep.subr.mxu0 0.0
    %108 = vmatpush1.msra.mxu0 0.0
    %109 = vmatprep.subr.mxu0 0.0
    %110 = vmatpush1.msra.mxu0 0.0
    %111 = vmatprep.subr.mxu0 0.0
    %112 = vmatpush1.msra.mxu0 0.0
    %113 = vmatprep.subr.mxu0 0.0
    %114 = vmatpush1.msra.mxu0 0.0
    %115 = vmatprep.subr.mxu0 0.0
    %116 = vmatpush1.msra.mxu0 0.0
    %117 = vmatprep.subr.mxu0 0.0
    %118 = vmatpush1.msra.mxu0 0.0
    %119 = vmatprep.subr.mxu0 0.0
    %120 = vmatpush1.msra.mxu0 0.0
    %121 = vmatprep.mubr.f32.mxu0 0.0
    %122 = vmatmul.mubr.f32.gmra.mrb[0].mxu0 %v33
    %v123 = vpop.f32.mrb[0].mxu0
    %v124 = vadd.f32 %v55, %v123
    %v125 = vpop.f32.mrb[0].mxu0
    %126 = vdwg.mxu0
    %v127 = vmax.f32 %v124, 0.0
    %v128 = vld [vmem:[%s3] sm:$0xff]
    %v129 = vld [vmem:[%s4] sm:$0x1]
    %v131 = vlaneseq
    %v132 = vshrl.u32 %v131, 7
    %v133 = vsub.s32 0, %v132
    %v134 = vrot.slane %v129, %v133
    %vm136 = vcmask 64512
    %v138 = vsel %vm136, %v127, 0
    %140 = vmatprep.subr.mxu0 0.0
    %141 = vmatpush1.msra.mxu0 %v128
    %142 = vmatprep.subr.mxu0 0.0
    %143 = vmatpush1.msra.mxu0 0.0
    %144 = vmatprep.subr.mxu0 0.0
    %145 = vmatpush1.msra.mxu0 0.0
    %146 = vmatprep.subr.mxu0 0.0
    %147 = vmatpush1.msra.mxu0 0.0
    %148 = vmatprep.subr.mxu0 0.0
    %149 = vmatpush1.msra.mxu0 0.0
    %150 = vmatprep.subr.mxu0 0.0
    %151 = vmatpush1.msra.mxu0 0.0
    %152 = vmatprep.subr.mxu0 0.0
    %153 = vmatpush1.msra.mxu0 0.0
    %154 = vmatprep.subr.mxu0 0.0
    %155 = vmatpush1.msra.mxu0 0.0
    %156 = vmatprep.subr.mxu0 0.0
    %157 = vmatpush1.msra.mxu0 0.0
    %158 = vmatprep.subr.mxu0 0.0
    %159 = vmatpush1.msra.mxu0 0.0
    %160 = vmatprep.subr.mxu0 0.0
    %161 = vmatpush1.msra.mxu0 0.0
    %162 = vmatprep.subr.mxu0 0.0
    %163 = vmatpush1.msra.mxu0 0.0
    %164 = vmatprep.subr.mxu0 0.0
    %165 = vmatpush1.msra.mxu0 0.0
    %166 = vmatprep.subr.mxu0 0.0
    %167 = vmatpush1.msra.mxu0 0.0
    %168 = vmatprep.subr.mxu0 0.0
    %169 = vmatpush1.msra.mxu0 0.0
    %170 = vmatprep.subr.mxu0 0.0
    %171 = vmatpush1.msra.mxu0 0.0
    %172 = vmatprep.subr.mxu0 0.0
    %173 = vmatpush1.msra.mxu0 0.0
    %174 = vmatprep.subr.mxu0 0.0
    %175 = vmatpush1.msra.mxu0 0.0
    %176 = vmatprep.subr.mxu0 0.0
    %177 = vmatpush1.msra.mxu0 0.0
    %178 = vmatprep.subr.mxu0 0.0
    %179 = vmatpush1.msra.mxu0 0.0
    %180 = vmatprep.subr.mxu0 0.0
    %181 = vmatpush1.msra.mxu0 0.0
    %182 = vmatprep.subr.mxu0 0.0
    %183 = vmatpush1.msra.mxu0 0.0
    %184 = vmatprep.subr.mxu0 0.0
    %185 = vmatpush1.msra.mxu0 0.0
    %186 = vmatprep.subr.mxu0 0.0
    %187 = vmatpush1.msra.mxu0 0.0
    %188 = vmatprep.subr.mxu0 0.0
    %189 = vmatpush1.msra.mxu0 0.0
    %190 = vmatprep.subr.mxu0 0.0
    %191 = vmatpush1.msra.mxu0 0.0
    %192 = vmatprep.subr.mxu0 0.0
    %193 = vmatpush1.msra.mxu0 0.0
    %194 = vmatprep.subr.mxu0 0.0
    %195 = vmatpush1.msra.mxu0 0.0
    %196 = vmatprep.subr.mxu0 0.0
    %197 = vmatpush1.msra.mxu0 0.0
    %198 = vmatprep.subr.mxu0 0.0
    %199 = vmatpush1.msra.mxu0 0.0
    %200 = vmatprep.subr.mxu0 0.0
    %201 = vmatpush1.msra.mxu0 0.0
    %202 = vmatprep.subr.mxu0 0.0
    %203 = vmatpush1.msra.mxu0 0.0
    %204 = vmatprep.mubr.f32.mxu0 0.0
    %205 = vmatmul.mubr.f32.gmra.mrb[0].mxu0 %v138
    %v206 = vpop.f32.mrb[0].mxu0
    %v207 = vadd.f32 %v134, %v206
    %v208 = vpop.f32.mrb[0].mxu0
    %209 = vdwg.mxu0
    %v210 = vmax.f32 %v207, 0.0
    %v211 = vld [vmem:[%s5] sm:$0xf]
    %v212 = vld [vmem:[%s6] sm:$0x1]
    %v214 = vlaneseq
    %v215 = vshrl.u32 %v214, 7
    %v216 = vsub.s32 0, %v215
    %v217 = vrot.slane %v212, %v216
    %vm219 = vcmask 31744
    %v221 = vsel %vm219, %v210, 0
    %vm223 = vcmask 1043456
    %v225 = vsel %vm223, %v211, 0
    %227 = vmatprep.subr.mxu0 0.0
    %228 = vmatpush1.msra.mxu0 %v225
    %229 = vmatprep.subr.mxu0 0.0
    %230 = vmatpush1.msra.mxu0 0.0
    %231 = vmatprep.subr.mxu0 0.0
    %232 = vmatpush1.msra.mxu0 0.0
    %233 = vmatprep.subr.mxu0 0.0
    %234 = vmatpush1.msra.mxu0 0.0
    %235 = vmatprep.subr.mxu0 0.0
    %236 = vmatpush1.msra.mxu0 0.0
    %237 = vmatprep.subr.mxu0 0.0
    %238 = vmatpush1.msra.mxu0 0.0
    %239 = vmatprep.subr.mxu0 0.0
    %240 = vmatpush1.msra.mxu0 0.0
    %241 = vmatprep.subr.mxu0 0.0
    %242 = vmatpush1.msra.mxu0 0.0
    %243 = vmatprep.subr.mxu0 0.0
    %244 = vmatpush1.msra.mxu0 0.0
    %245 = vmatprep.subr.mxu0 0.0
    %246 = vmatpush1.msra.mxu0 0.0
    %247 = vmatprep.subr.mxu0 0.0
    %248 = vmatpush1.msra.mxu0 0.0
    %249 = vmatprep.subr.mxu0 0.0
    %250 = vmatpush1.msra.mxu0 0.0
    %251 = vmatprep.subr.mxu0 0.0
    %252 = vmatpush1.msra.mxu0 0.0
    %253 = vmatprep.subr.mxu0 0.0
    %254 = vmatpush1.msra.mxu0 0.0
    %255 = vmatprep.subr.mxu0 0.0
    %256 = vmatpush1.msra.mxu0 0.0
    %257 = vmatprep.subr.mxu0 0.0
    %258 = vmatpush1.msra.mxu0 0.0
    %259 = vmatprep.subr.mxu0 0.0
    %260 = vmatpush1.msra.mxu0 0.0
    %261 = vmatprep.subr.mxu0 0.0
    %262 = vmatpush1.msra.mxu0 0.0
    %263 = vmatprep.subr.mxu0 0.0
    %264 = vmatpush1.msra.mxu0 0.0
    %265 = vmatprep.subr.mxu0 0.0
    %266 = vmatpush1.msra.mxu0 0.0
    %267 = vmatprep.subr.mxu0 0.0
    %268 = vmatpush1.msra.mxu0 0.0
    %269 = vmatprep.subr.mxu0 0.0
    %270 = vmatpush1.msra.mxu0 0.0
    %271 = vmatprep.subr.mxu0 0.0
    %272 = vmatpush1.msra.mxu0 0.0
    %273 = vmatprep.subr.mxu0 0.0
    %274 = vmatpush1.msra.mxu0 0.0
    %275 = vmatprep.subr.mxu0 0.0
    %276 = vmatpush1.msra.mxu0 0.0
    %277 = vmatprep.subr.mxu0 0.0
    %278 = vmatpush1.msra.mxu0 0.0
    %279 = vmatprep.subr.mxu0 0.0
    %280 = vmatpush1.msra.mxu0 0.0
    %281 = vmatprep.subr.mxu0 0.0
    %282 = vmatpush1.msra.mxu0 0.0
    %283 = vmatprep.subr.mxu0 0.0
    %284 = vmatpush1.msra.mxu0 0.0
    %285 = vmatprep.subr.mxu0 0.0
    %286 = vmatpush1.msra.mxu0 0.0
    %287 = vmatprep.subr.mxu0 0.0
    %288 = vmatpush1.msra.mxu0 0.0
    %289 = vmatprep.subr.mxu0 0.0
    %290 = vmatpush1.msra.mxu0 0.0
    %291 = vmatprep.mubr.f32.mxu0 0.0
    %292 = vmatmul.mubr.f32.gmra.mrb[0].mxu0 %v221
    %v293 = vpop.f32.mrb[0].mxu0
    %v294 = vadd.f32 %v217, %v293
    %v295 = vpop.f32.mrb[0].mxu0
    %296 = vdwg.mxu0
    %v297 = vmax.f32 %v294, 0.0
    %v298 = vld [vmem:[%s7] sm:$0xff]
    %v299 = vld [vmem:[%s8] sm:$0x1]
    %v301 = vlaneseq
    %v302 = vshrl.u32 %v301, 7
    %v303 = vsub.s32 0, %v302
    %v304 = vrot.slane %v299, %v303
    %v307 = vsel %vm136, %v297, 0
    %309 = vmatprep.subr.mxu0 0.0
    %310 = vmatpush1.msra.mxu0 %v298
    %311 = vmatprep.subr.mxu0 0.0
    %312 = vmatpush1.msra.mxu0 0.0
    %313 = vmatprep.subr.mxu0 0.0
    %314 = vmatpush1.msra.mxu0 0.0
    %315 = vmatprep.subr.mxu0 0.0
    %316 = vmatpush1.msra.mxu0 0.0
    %317 = vmatprep.subr.mxu0 0.0
    %318 = vmatpush1.msra.mxu0 0.0
    %319 = vmatprep.subr.mxu0 0.0
    %320 = vmatpush1.msra.mxu0 0.0
    %321 = vmatprep.subr.mxu0 0.0
    %322 = vmatpush1.msra.mxu0 0.0
    %323 = vmatprep.subr.mxu0 0.0
    %324 = vmatpush1.msra.mxu0 0.0
    %325 = vmatprep.subr.mxu0 0.0
    %326 = vmatpush1.msra.mxu0 0.0
    %327 = vmatprep.subr.mxu0 0.0
    %328 = vmatpush1.msra.mxu0 0.0
    %329 = vmatprep.subr.mxu0 0.0
    %330 = vmatpush1.msra.mxu0 0.0
    %331 = vmatprep.subr.mxu0 0.0
    %332 = vmatpush1.msra.mxu0 0.0
    %333 = vmatprep.subr.mxu0 0.0
    %334 = vmatpush1.msra.mxu0 0.0
    %335 = vmatprep.subr.mxu0 0.0
    %336 = vmatpush1.msra.mxu0 0.0
    %337 = vmatprep.subr.mxu0 0.0
    %338 = vmatpush1.msra.mxu0 0.0
    %339 = vmatprep.subr.mxu0 0.0
    %340 = vmatpush1.msra.mxu0 0.0
    %341 = vmatprep.subr.mxu0 0.0
    %342 = vmatpush1.msra.mxu0 0.0
    %343 = vmatprep.subr.mxu0 0.0
    %344 = vmatpush1.msra.mxu0 0.0
    %345 = vmatprep.subr.mxu0 0.0
    %346 = vmatpush1.msra.mxu0 0.0
    %347 = vmatprep.subr.mxu0 0.0
    %348 = vmatpush1.msra.mxu0 0.0
    %349 = vmatprep.subr.mxu0 0.0
    %350 = vmatpush1.msra.mxu0 0.0
    %351 = vmatprep.subr.mxu0 0.0
    %352 = vmatpush1.msra.mxu0 0.0
    %353 = vmatprep.subr.mxu0 0.0
    %354 = vmatpush1.msra.mxu0 0.0
    %355 = vmatprep.subr.mxu0 0.0
    %356 = vmatpush1.msra.mxu0 0.0
    %357 = vmatprep.subr.mxu0 0.0
    %358 = vmatpush1.msra.mxu0 0.0
    %359 = vmatprep.subr.mxu0 0.0
    %360 = vmatpush1.msra.mxu0 0.0
    %361 = vmatprep.subr.mxu0 0.0
    %362 = vmatpush1.msra.mxu0 0.0
    %363 = vmatprep.subr.mxu0 0.0
    %364 = vmatpush1.msra.mxu0 0.0
    %365 = vmatprep.subr.mxu0 0.0
    %366 = vmatpush1.msra.mxu0 0.0
    %367 = vmatprep.subr.mxu0 0.0
    %368 = vmatpush1.msra.mxu0 0.0
    %369 = vmatprep.subr.mxu0 0.0
    %370 = vmatpush1.msra.mxu0 0.0
    %371 = vmatprep.subr.mxu0 0.0
    %372 = vmatpush1.msra.mxu0 0.0
    %373 = vmatprep.mubr.f32.mxu0 0.0
    %374 = vmatmul.mubr.f32.gmra.mrb[0].mxu0 %v307
    %v375 = vpop.f32.mrb[0].mxu0
    %v376 = vadd.f32 %v304, %v375
    %v377 = vpop.f32.mrb[0].mxu0
    %378 = vdwg.mxu0
    %379 = vst [vmem:[#allocation2] sm:$0xff] %v376
    // Predicated region
    $region38: #{tpu_custom_call.1} parent=1 // pred_check
      _
    $region39: #{tpu_custom_call.1} parent=1 // pred_check_branch
      %381 = sbr.rel (0) target = $region41
    $region40: #{tpu_custom_call.1} parent=1 // pred_region
      %s383 = ssub.s32 128, 128
      %384 = vsyncadd [#allocation3], %s383
      %s386 = sshll.u32 [#allocation2], 4
      %s387 = int_to_ptr.vmem [resolvable:$true] %s386
      %389 = dma.vmem_to_hbm [thread:$0]  %s387, 128, %s9, [#allocation3]
    $region41: #{tpu_custom_call.1} parent=1 // pred_fallthru
      _
    // Predicated region
    $region42: #{tpu_custom_call.1} parent=1 // pred_check
      _
    $region43: #{tpu_custom_call.1} parent=1 // pred_check_branch
      %391 = sbr.rel (0) target = $region45
    $region44: #{tpu_custom_call.1} parent=1 // pred_region
      %392 = dma.done [#allocation3], 128
    $region45: #{tpu_custom_call.1} parent=1 // pred_fallthru
      _
    %393 = vsyncpa [#allocation3], 1

</llo_original>
